<compile_context>
chip_gen: v7x
topology: tpu7x:2x2x1
jax: 0.10.0
libtpu: 0.0.40
codegen_flags: <defaults>
</compile_context>

<pallas_src>
import jax
import jax.numpy as jnp
from jax import lax
from jax.experimental import pallas as pl
from jax.experimental.pallas import tpu as pltpu


def _round_up(x, m):
    return ((x + m - 1) // m) * m


def _cdiv(a, b):
    return -(-a // b)


def _physical_vmem_bytes():
    """Best-effort physical VMEM size; conservative (v7x = 64 MiB) fallback."""
    try:
        return int(pltpu.get_tpu_info().vmem_capacity_bytes)
    except Exception:
        pass
    try:
        kind = jax.devices()[0].device_kind.lower()
        if "v5" in kind or "v6" in kind:
            return 128 * 1024 * 1024
    except Exception:
        pass
    return 64 * 1024 * 1024


def _choose_balanced_tiles(m, n, k, tm_cap, tn_cap, tk_cap):
    """Tiles <= caps that minimise padding, keeping (8, 128) alignment.

    E.g. m=300 with tm_cap=512 gives tm=304 (4 dead rows) instead of padding a
    256-tile up to 512 (212 dead rows)."""
    tm = _round_up(_cdiv(m, _cdiv(m, tm_cap)), 8)
    tn = _round_up(_cdiv(n, _cdiv(n, tn_cap)), 128)
    tk = _round_up(_cdiv(k, _cdiv(k, tk_cap)), 128)
    return tm, tn, tk


def _plan_tiling(m, n, k, in_bytes, out_bytes, budget,
                 tm_cap=512, tn_cap=512, tk_cap=1024):
    """Pick tiles + decide whether the whole weight can live in VMEM."""
    tm = tn = tk = None
    for _ in range(16):
        tm, tn, tk = _choose_balanced_tiles(m, n, k, tm_cap, tn_cap, tk_cap)
        m_pad, n_pad, k_pad = _round_up(m, tm), _round_up(n, tn), _round_up(k, tk)
        # double-buffered x and out blocks, f32 accumulator, bias
        common = (2 * tm * tk * in_bytes      # x tiles (double buffered)
                  + 2 * tm * tn * out_bytes   # out tiles (double buffered)
                  + tm * tn * 4               # f32 accumulator scratch
                  + 2 * tn * 4)               # bias tiles
        resident = common + 2 * n_pad * k_pad * in_bytes   # weight fully in VMEM
        streamed = common + 2 * tn * tk * in_bytes         # weight streamed per tile
        if resident <= budget // 2:
            return dict(tm=tm, tn=tn, tk=tk, m_pad=m_pad, n_pad=n_pad,
                        k_pad=k_pad, weight_resident=True)
        if streamed <= budget:
            return dict(tm=tm, tn=tn, tk=tk, m_pad=m_pad, n_pad=n_pad,
                        k_pad=k_pad, weight_resident=False)
        # Shrink and retry (only relevant when the budget is tight, e.g. v7x).
        if tk_cap > 512:
            tk_cap //= 2
        elif tm_cap > 128:
            tm_cap //= 2
        elif tn_cap > 128:
            tn_cap //= 2
        elif tk_cap > 128:
            tk_cap //= 2
        else:
            break
    m_pad, n_pad, k_pad = _round_up(m, tm), _round_up(n, tn), _round_up(k, tk)
    return dict(tm=tm, tn=tn, tk=tk, m_pad=m_pad, n_pad=n_pad, k_pad=k_pad,
                weight_resident=False)


def _make_linear_kernel(tm, tn, tk, slice_weight):
    def kernel(x_ref, w_ref, b_ref, o_ref, acc_ref):
        # x_ref: (tm, tk)   activations
        # w_ref: (tn, tk) streamed tile, OR (n_pad, k_pad) VMEM-resident weight
        # b_ref: (1,  tn)   f32 bias tile
        # o_ref: (tm, tn)   output tile
        # acc_ref: (tm, tn) f32 accumulator, persists across the K grid axis
        k = pl.program_id(2)

        @pl.when(k == 0)
        def _():
            # Initialise the accumulator with the broadcast bias: removes the
            # bias read + VPU add from the epilogue critical path.
            acc_ref[...] = jnp.broadcast_to(
                b_ref[...].astype(jnp.float32), acc_ref.shape)

        if slice_weight:
            # Weight is fully resident in VMEM (DMA'd once for the whole
            # grid); slice out the current (tn, tk) tile.
            j = pl.program_id(1)
            n0 = pl.multiple_of(j * tn, tn)
            k0 = pl.multiple_of(k * tk, tk)
            w_tile = w_ref[pl.ds(n0, tn), pl.ds(k0, tk)]
        else:
            w_tile = w_ref[...]

        # Contract last dims of both operands == x @ W^T (weight stays in the
        # PyTorch (out_features, in_features) layout; no HBM transpose).
        acc_ref[...] += lax.dot_general(
            x_ref[...], w_tile,
            dimension_numbers=(((1,), (1,)), ((), ())),
            preferred_element_type=jnp.float32,
        )

        @pl.when(k == pl.num_programs(2) - 1)
        def _():
            o_ref[...] = acc_ref[...].astype(o_ref.dtype)

    return kernel


def linear_forward(x, weight, bias, *, operand_dtype=None,
                   tm=512, tn=512, tk=1024, vmem_fraction=0.75):
    """Equivalent of `linear.forward`.

    x:      any shape whose trailing flatten gives (-1, n_inputs)
    weight: (n_outputs, n_inputs)   -- PyTorch nn.Linear convention
    bias:   (n_outputs,)
    operand_dtype: e.g. jnp.bfloat16 to run the MXU at its native rate and
        halve HBM traffic (accumulation stays f32).  None keeps x's dtype.
    returns (batch_flat, n_outputs) in x's dtype.
    """
    n_outputs, n_inputs = weight.shape
    x2d = x.reshape(-1, n_inputs)            # x.view(-1, n_inputs)
    m = x2d.shape[0]
    out_dtype = x2d.dtype

    if operand_dtype is not None:
        x2d = x2d.astype(operand_dtype)
        weight = weight.astype(operand_dtype)

    in_bytes = jnp.dtype(x2d.dtype).itemsize
    out_bytes = jnp.dtype(out_dtype).itemsize

    budget = int(_physical_vmem_bytes() * vmem_fraction)
    plan = _plan_tiling(m, n_outputs, n_inputs, in_bytes, out_bytes, budget,
                        tm_cap=tm, tn_cap=tn, tk_cap=tk)
    tm, tn, tk = plan["tm"], plan["tn"], plan["tk"]
    m_pad, n_pad, k_pad = plan["m_pad"], plan["n_pad"], plan["k_pad"]
    weight_resident = plan["weight_resident"]

    # Zero-pad to tile multiples (no-op when already aligned).  K padding
    # contributes 0 to the dot; padded M/N rows/cols are sliced off.
    # For repeated forward calls with static params, pad weight/bias once
    # outside this function to hoist it off the per-call path.
    if (m_pad, k_pad) != (m, n_inputs):
        x2d = jnp.pad(x2d, ((0, m_pad - m), (0, k_pad - n_inputs)))
    w_p = weight
    if (n_pad, k_pad) != (n_outputs, n_inputs):
        w_p = jnp.pad(weight, ((0, n_pad - n_outputs), (0, k_pad - n_inputs)))
    b_p = bias.astype(jnp.float32).reshape(1, n_outputs)
    if n_pad != n_outputs:
        b_p = jnp.pad(b_p, ((0, 0), (0, n_pad - n_outputs)))

    grid = (m_pad // tm, n_pad // tn, k_pad // tk)

    if weight_resident:
        # Constant block index across the whole grid -> DMA'd once, stays in
        # VMEM; kernel slices (tn, tk) tiles out of it when needed.
        w_spec = pl.BlockSpec((n_pad, k_pad), lambda i, j, k: (0, 0))
        slice_weight = (n_pad > tn) or (k_pad > tk)
    else:
        w_spec = pl.BlockSpec((tn, tk), lambda i, j, k: (j, k))
        slice_weight = False

    # Advisory cost estimate so XLA schedules the surrounding pad/slice ops.
    flops = 2 * m_pad * n_pad * k_pad
    w_traffic = n_pad * k_pad if weight_resident else grid[0] * n_pad * k_pad
    bytes_accessed = (grid[1] * m_pad * k_pad * in_bytes
                      + w_traffic * in_bytes
                      + m_pad * n_pad * out_bytes
                      + n_pad * 4)

    kernel = _make_linear_kernel(tm, tn, tk, slice_weight)

    out_padded = pl.pallas_call(
        kernel,
        out_shape=jax.ShapeDtypeStruct((m_pad, n_pad), out_dtype),
        grid_spec=pltpu.PrefetchScalarGridSpec(
            num_scalar_prefetch=0,
            grid=grid,
            in_specs=[
                # activations: (tm, tk) tile at (i, k)
                pl.BlockSpec((tm, tk), lambda i, j, k: (i, k)),
                # weight (resident or streamed), PyTorch (N, K) layout
                w_spec,
                # f32 bias: (1, tn) tile at (0, j)
                pl.BlockSpec((1, tn), lambda i, j, k: (0, j)),
            ],
            out_specs=pl.BlockSpec((tm, tn), lambda i, j, k: (i, j)),
            scratch_shapes=[pltpu.VMEM((tm, tn), jnp.float32)],
        ),
        compiler_params=pltpu.CompilerParams(
            dimension_semantics=("parallel", "parallel", "arbitrary"),
            vmem_limit_bytes=budget,
        ),
        cost_estimate=pl.CostEstimate(
            flops=flops, transcendentals=0, bytes_accessed=bytes_accessed),
    )(x2d, w_p, b_p)

    return out_padded[:m, :n_outputs]


def init_linear_params(key, n_inputs, n_outputs, dtype=jnp.float32):
    """Deterministic init matching the module's __init__:
       - weight: xavier_uniform_, shape (n_outputs, n_inputs)
       - bias:   PyTorch nn.Linear default U(-1/sqrt(fan_in), 1/sqrt(fan_in))
    """
    kw, kb = jax.random.split(key)
    limit_w = (6.0 / (n_inputs + n_outputs)) ** 0.5          # xavier uniform
    weight = jax.random.uniform(kw, (n_outputs, n_inputs), dtype,
                                minval=-limit_w, maxval=limit_w)
    limit_b = 1.0 / (n_inputs ** 0.5)
    bias = jax.random.uniform(kb, (n_outputs,), dtype,
                              minval=-limit_b, maxval=limit_b)
    return weight, bias


if __name__ == "__main__":
    n_inputs, n_outputs = 32, 16

    key = jax.random.PRNGKey(0)
    kx, kp = jax.random.split(key)

    # Input with extra leading structure to exercise x.view(-1, n_inputs):
    x = jax.random.normal(kx, (2, 4, n_inputs), dtype=jnp.float32)  # -> (8, 32)
    weight, bias = init_linear_params(kp, n_inputs, n_outputs)

    ref = x.reshape(-1, n_inputs) @ weight.T + bias

    # f32 path: strict parity with the PyTorch module.
    out = jax.block_until_ready(linear_forward(x, weight, bias))
    assert out.shape == (8, n_outputs)
    assert jnp.allclose(out, ref, atol=1e-5, rtol=1e-5)

    # bf16-operand path (native MXU rate, f32 accumulation): looser tolerance.
    out_bf16 = jax.block_until_ready(
        linear_forward(x, weight, bias, operand_dtype=jnp.bfloat16))
    assert out_bf16.shape == (8, n_outputs)
    assert jnp.allclose(out_bf16, ref, atol=5e-2, rtol=5e-2)

    print("KERNEL_OK")
</pallas_src>

<mosaic_0001>
module attributes {stable_mosaic.version = 11 : i64} {
  func.func @kernel(%arg0: i32, %arg1: i32, %arg2: i32, %arg3: memref<8x128xf32, #tpu.memory_space<vmem>>, %arg4: memref<128x128xf32, #tpu.memory_space<vmem>>, %arg5: memref<1x128xf32, #tpu.memory_space<vmem>>, %arg6: memref<8x128xf32, #tpu.memory_space<vmem>>, %arg7: memref<8x128xf32, #tpu.memory_space<vmem>>) attributes {dimension_semantics = [#tpu.dimension_semantics<parallel>, #tpu.dimension_semantics<parallel>, #tpu.dimension_semantics<arbitrary>], iteration_bounds = array<i64: 1, 1, 1>, scalar_prefetch = 0 : i64, scratch_operands = 1 : i64, tpu.core_type = #tpu.core_type<tc>, window_params = [{transform_indices = @transform_0, window_bounds = array<i64: 8, 128>}, {pipeline_mode = #tpu.pipeline_mode<synchronous>, transform_indices = @transform_1, window_bounds = array<i64: 128, 128>}, {transform_indices = @transform_2, window_bounds = array<i64: 1, 128>}, {transform_indices = @transform_3, window_bounds = array<i64: 8, 128>}]} {
    %c0_i32 = arith.constant 0 : i32
    %0 = arith.cmpi eq, %arg2, %c0_i32 : i32
    %1 = arith.extui %0 : i1 to i32
    %c0_i32_0 = arith.constant 0 : i32
    %2 = arith.cmpi ne, %1, %c0_i32_0 : i32
    scf.if %2 {
      %c0_10 = arith.constant 0 : index
      %c0_11 = arith.constant 0 : index
      %12 = vector.load %arg5[%c0_10, %c0_11] : memref<1x128xf32, #tpu.memory_space<vmem>>, vector<1x128xf32>
      %13 = vector.shape_cast %12 : vector<1x128xf32> to vector<1x128xf32>
      %14 = vector.broadcast %13 : vector<1x128xf32> to vector<8x128xf32>
      %c0_12 = arith.constant 0 : index
      %c0_13 = arith.constant 0 : index
      %15 = vector.load %arg7[%c0_12, %c0_13] : memref<8x128xf32, #tpu.memory_space<vmem>>, vector<8x128xf32>
      tpu.vector_store %arg7[%c0_12, %c0_13], %14 {strides = array<i32>} : memref<8x128xf32, #tpu.memory_space<vmem>>, vector<8x128xf32>,
    } else {
    }
    %c0 = arith.constant 0 : index
    %c0_1 = arith.constant 0 : index
    %3 = vector.load %arg4[%c0, %c0_1] : memref<128x128xf32, #tpu.memory_space<vmem>>, vector<128x128xf32>
    %c0_2 = arith.constant 0 : index
    %c0_3 = arith.constant 0 : index
    %4 = vector.load %arg7[%c0_2, %c0_3] : memref<8x128xf32, #tpu.memory_space<vmem>>, vector<8x128xf32>
    %c0_4 = arith.constant 0 : index
    %c0_5 = arith.constant 0 : index
    %5 = vector.load %arg3[%c0_4, %c0_5] : memref<8x128xf32, #tpu.memory_space<vmem>>, vector<8x128xf32>
    %cst = arith.constant dense<0.000000e+00> : vector<8x128xf32>
    %6 = tpu.matmul %5, %3, %cst {dimension_numbers = #tpu.dot_dimension_numbers<[1], [1], [0], [0], [0, 0, 1, 0], [], []>} : vector<8x128xf32>, vector<128x128xf32>, vector<8x128xf32> -> vector<8x128xf32>
    %7 = arith.addf %4, %6 : vector<8x128xf32>
    %c0_6 = arith.constant 0 : index
    %c0_7 = arith.constant 0 : index
    %8 = vector.load %arg7[%c0_6, %c0_7] : memref<8x128xf32, #tpu.memory_space<vmem>>, vector<8x128xf32>
    tpu.vector_store %arg7[%c0_6, %c0_7], %7 {strides = array<i32>} : memref<8x128xf32, #tpu.memory_space<vmem>>, vector<8x128xf32>,
    %c0_i32_8 = arith.constant 0 : i32
    %9 = arith.cmpi eq, %arg2, %c0_i32_8 : i32
    %10 = arith.extui %9 : i1 to i32
    %c0_i32_9 = arith.constant 0 : i32
    %11 = arith.cmpi ne, %10, %c0_i32_9 : i32
    scf.if %11 {
      %c0_10 = arith.constant 0 : index
      %c0_11 = arith.constant 0 : index
      %12 = vector.load %arg7[%c0_10, %c0_11] : memref<8x128xf32, #tpu.memory_space<vmem>>, vector<8x128xf32>
      %c0_12 = arith.constant 0 : index
      %c0_13 = arith.constant 0 : index
      %13 = vector.load %arg6[%c0_12, %c0_13] : memref<8x128xf32, #tpu.memory_space<vmem>>, vector<8x128xf32>
      tpu.vector_store %arg6[%c0_12, %c0_13], %12 {strides = array<i32>} : memref<8x128xf32, #tpu.memory_space<vmem>>, vector<8x128xf32>,
    } else {
    }
    return
  }
  func.func @transform_0(%arg0: i32, %arg1: i32, %arg2: i32) -> (i32, i32) {
    %c0_i32 = arith.constant 0 : i32
    return %arg0, %arg2 : i32, i32
  }
  func.func @transform_1(%arg0: i32, %arg1: i32, %arg2: i32) -> (i32, i32) {
    %c0_i32 = arith.constant 0 : i32
    %c0_i32_0 = arith.constant 0 : i32
    %c0_i32_1 = arith.constant 0 : i32
    return %c0_i32, %c0_i32_0 : i32, i32
  }
  func.func @transform_2(%arg0: i32, %arg1: i32, %arg2: i32) -> (i32, i32) {
    %c0_i32 = arith.constant 0 : i32
    %c0_i32_0 = arith.constant 0 : i32
    return %c0_i32, %arg1 : i32, i32
  }
  func.func @transform_3(%arg0: i32, %arg1: i32, %arg2: i32) -> (i32, i32) {
    %c0_i32 = arith.constant 0 : i32
    return %arg0, %arg1 : i32, i32
  }
}

</mosaic_0001>

<llo_original>
// kernel: tpu_custom_call.1
$region0: #{tpu_custom_call.1}
  #allocation0 [shape = 'u32[]', space=smem, size = 0x4, offset = 0x4, fixed_abs, tag = 'smem constant byte address 0x4 - core index']
  #allocation1 [shape = 'u32[144,128]{1,0:T(1,128)}', space=vmem, size = 0x12000, scoped, tag = 'internal scratch']
  #allocation2 [shape = 'f32[8,128]{1,0:T(8,128)}', space=vmem, size = 0x1000, scoped, tag = 'scratch operand']
  %s0 = inlined_call_operand.hbm [shape: f32[8,128], index: 0, kind: input, shape index: {}]
  %s1 = inlined_call_operand.hbm [shape: f32[128,128], index: 1, kind: input, shape index: {}]
  %s2 = inlined_call_operand.vmem [shape: f32[1,128], index: 2, kind: input, shape index: {}]
  %s3 = inlined_call_operand.hbm [shape: f32[8,128], index: 3, kind: output, shape index: {}]
  %s4 = sld [smem:[#allocation0]]
  $region38: #{tpu_custom_call.1} parent=0
    _
  %s6 = ssub.s32 1, %s4
  %s7 = scalar_select 0, %s6, %s4
  $region1: #{tpu_custom_call.1} parent=0
    #allocation3 [shape = 'u8[4096]{0}', space=vmem, size = 0x1000, scoped, tag = 'input window, operand 0, single buffered']
    #allocation4 [shape = 's32[1]{0}', space=sflag, size = 0x4, scoped, tag = 'scoped memory for tpu_custom_call.1']
    #allocation5 [shape = 's32[1]{0}', space=sflag, size = 0x4, scoped, tag = 'scoped memory for tpu_custom_call.1']
    #allocation6 [shape = 'u8[65536]{0}', space=vmem, size = 0x10000, scoped, tag = 'input window, operand 1, single buffered']
    #allocation7 [shape = 's32[1]{0}', space=sflag, size = 0x4, scoped, tag = 'scoped memory for tpu_custom_call.1']
    #allocation8 [shape = 'u8[4096]{0}', space=vmem, size = 0x1000, scoped, tag = 'output window, operand 0, single buffered']
    %8 = vsyncpa [#allocation4], 0
    %9 = vsyncpa [#allocation7], 0
    %10 = vsyncpa [#allocation5], 0
    // Predicated region
    $region2: #{tpu_custom_call.1} parent=1 // pred_check
      _
    $region3: #{tpu_custom_call.1} parent=1 // pred_check_branch
      %12 = sbr.rel (0) target = $region5
    $region4: #{tpu_custom_call.1} parent=1 // pred_region
      %s14 = ssub.s32 128, 128
      %15 = vsyncadd [#allocation4], %s14
      %s17 = sshll.u32 [#allocation3], 4
      %s18 = int_to_ptr.vmem [resolvable:$true] %s17
      %20 = dma.hbm_to_vmem [thread:$0]  %s0, 128, %s18, [#allocation4]
    $region5: #{tpu_custom_call.1} parent=1 // pred_fallthru
      _
    // Predicated region
    $region6: #{tpu_custom_call.1} parent=1 // pred_check
      _
    $region7: #{tpu_custom_call.1} parent=1 // pred_check_branch
      %22 = sbr.rel (0) target = $region9
    $region8: #{tpu_custom_call.1} parent=1 // pred_region
      %s24 = ssub.s32 2048, 2048
      %25 = vsyncadd [#allocation7], %s24
      %s26 = sshll.u32 [#allocation6], 4
      %s27 = int_to_ptr.vmem [resolvable:$true] %s26
      %32 = dma.hbm_to_vmem [thread:$0]  %s1, 2048, %s27, [#allocation7], 128, 128, 8
    $region9: #{tpu_custom_call.1} parent=1 // pred_fallthru
      _
    // Predicated region
    $region10: #{tpu_custom_call.1} parent=1 // pred_check
      _
    $region11: #{tpu_custom_call.1} parent=1 // pred_check_branch
      %34 = sbr.rel (0) target = $region13
    $region12: #{tpu_custom_call.1} parent=1 // pred_region
      _
    $region13: #{tpu_custom_call.1} parent=1 // pred_fallthru
      _
    // Predicated region
    $region14: #{tpu_custom_call.1} parent=1 // pred_check
      _
    $region15: #{tpu_custom_call.1} parent=1 // pred_check_branch
      %36 = sbr.rel (0) target = $region17
    $region16: #{tpu_custom_call.1} parent=1 // pred_region
      %37 = dma.done [#allocation4], 128
    $region17: #{tpu_custom_call.1} parent=1 // pred_fallthru
      _
    // Predicated region
    $region18: #{tpu_custom_call.1} parent=1 // pred_check
      _
    $region19: #{tpu_custom_call.1} parent=1 // pred_check_branch
      %39 = sbr.rel (0) target = $region21
    $region20: #{tpu_custom_call.1} parent=1 // pred_region
      %40 = dma.done [#allocation7], 2048
    $region21: #{tpu_custom_call.1} parent=1 // pred_fallthru
      _
    %p41 = scmp.eq.s32.totalorder 0, 0
    // Predicated region
    $region22: #{tpu_custom_call.1} parent=1 // pred_check
      %p42 = pneg %p41
    $region23: #{tpu_custom_call.1} parent=1 // pred_check_branch
      %44 = sbr.rel (%p42) target = $region25
    $region24: #{tpu_custom_call.1} parent=1 // pred_region
      %v45 = vld [vmem:[%s2] sm:$0x1]
      %v47 = vlaneseq
      %v48 = vshrl.u32 %v47, 7
      %v49 = vsub.s32 0, %v48
      %v50 = vrot.slane %v45, %v49
      %52 = vst [vmem:[#allocation2] sm:$0xff] %v50
    $region25: #{tpu_custom_call.1} parent=1 // pred_fallthru
      _
    %v53 = vld [vmem:[#allocation6] sm:$0xff]
    %v54 = vld [vmem:[#allocation6 + $0x8] sm:$0xff]
    %v55 = vld [vmem:[#allocation6 + $0x10] sm:$0xff]
    %v56 = vld [vmem:[#allocation6 + $0x18] sm:$0xff]
    %v57 = vld [vmem:[#allocation6 + $0x20] sm:$0xff]
    %v58 = vld [vmem:[#allocation6 + $0x28] sm:$0xff]
    %v59 = vld [vmem:[#allocation6 + $0x30] sm:$0xff]
    %v60 = vld [vmem:[#allocation6 + $0x38] sm:$0xff]
    %v61 = vld [vmem:[#allocation6 + $0x40] sm:$0xff]
    %v62 = vld [vmem:[#allocation6 + $0x48] sm:$0xff]
    %v63 = vld [vmem:[#allocation6 + $0x50] sm:$0xff]
    %v64 = vld [vmem:[#allocation6 + $0x58] sm:$0xff]
    %v65 = vld [vmem:[#allocation6 + $0x60] sm:$0xff]
    %v66 = vld [vmem:[#allocation6 + $0x68] sm:$0xff]
    %v67 = vld [vmem:[#allocation6 + $0x70] sm:$0xff]
    %v68 = vld [vmem:[#allocation6 + $0x78] sm:$0xff]
    %v69 = vld [vmem:[#allocation2] sm:$0xff]
    %v70 = vld [vmem:[#allocation3] sm:$0xff]
    %71 = vmatprep.subr.mxu0 0.0
    %72 = vmatpush1.xpose.msra.mxu0 %v53
    %73 = vmatprep.subr.mxu0 0.0
    %74 = vmatpush1.xpose.msra.mxu0 %v54
    %75 = vmatprep.subr.mxu0 0.0
    %76 = vmatpush1.xpose.msra.mxu0 %v55
    %77 = vmatprep.subr.mxu0 0.0
    %78 = vmatpush1.xpose.msra.mxu0 %v56
    %79 = vmatprep.subr.mxu0 0.0
    %80 = vmatpush1.xpose.msra.mxu0 %v57
    %81 = vmatprep.subr.mxu0 0.0
    %82 = vmatpush1.xpose.msra.mxu0 %v58
    %83 = vmatprep.subr.mxu0 0.0
    %84 = vmatpush1.xpose.msra.mxu0 %v59
    %85 = vmatprep.subr.mxu0 0.0
    %86 = vmatpush1.xpose.msra.mxu0 %v60
    %87 = vmatprep.subr.mxu0 0.0
    %88 = vmatpush1.xpose.msra.mxu0 %v61
    %89 = vmatprep.subr.mxu0 0.0
    %90 = vmatpush1.xpose.msra.mxu0 %v62
    %91 = vmatprep.subr.mxu0 0.0
    %92 = vmatpush1.xpose.msra.mxu0 %v63
    %93 = vmatprep.subr.mxu0 0.0
    %94 = vmatpush1.xpose.msra.mxu0 %v64
    %95 = vmatprep.subr.mxu0 0.0
    %96 = vmatpush1.xpose.msra.mxu0 %v65
    %97 = vmatprep.subr.mxu0 0.0
    %98 = vmatpush1.xpose.msra.mxu0 %v66
    %99 = vmatprep.subr.mxu0 0.0
    %100 = vmatpush1.xpose.msra.mxu0 %v67
    %101 = vmatprep.subr.mxu0 0.0
    %102 = vmatpush1.xpose.msra.mxu0 %v68
    %103 = vmatprep.subr.mxu0 0.0
    %104 = vmatpush1.xpose.msra.mxu0 0.0
    %105 = vmatprep.subr.mxu0 0.0
    %106 = vmatpush1.xpose.msra.mxu0 0.0
    %107 = vmatprep.subr.mxu0 0.0
    %108 = vmatpush1.xpose.msra.mxu0 0.0
    %109 = vmatprep.subr.mxu0 0.0
    %110 = vmatpush1.xpose.msra.mxu0 0.0
    %111 = vmatprep.subr.mxu0 0.0
    %112 = vmatpush1.xpose.msra.mxu0 0.0
    %113 = vmatprep.subr.mxu0 0.0
    %114 = vmatpush1.xpose.msra.mxu0 0.0
    %115 = vmatprep.subr.mxu0 0.0
    %116 = vmatpush1.xpose.msra.mxu0 0.0
    %117 = vmatprep.subr.mxu0 0.0
    %118 = vmatpush1.xpose.msra.mxu0 0.0
    %119 = vmatprep.subr.mxu0 0.0
    %120 = vmatpush1.xpose.msra.mxu0 0.0
    %121 = vmatprep.subr.mxu0 0.0
    %122 = vmatpush1.xpose.msra.mxu0 0.0
    %123 = vmatprep.subr.mxu0 0.0
    %124 = vmatpush1.xpose.msra.mxu0 0.0
    %125 = vmatprep.subr.mxu0 0.0
    %126 = vmatpush1.xpose.msra.mxu0 0.0
    %127 = vmatprep.subr.mxu0 0.0
    %128 = vmatpush1.xpose.msra.mxu0 0.0
    %129 = vmatprep.subr.mxu0 0.0
    %130 = vmatpush1.xpose.msra.mxu0 0.0
    %131 = vmatprep.subr.mxu0 0.0
    %132 = vmatpush1.xpose.msra.mxu0 0.0
    %133 = vmatprep.subr.mxu0 0.0
    %134 = vmatpush1.xpose.msra.mxu0 0.0
    %135 = vmatprep.mubr.f32.mxu0 0.0
    %136 = vmatmul.mubr.f32.gmra.mrb[0].mxu0 %v70
    %v137 = vpop.f32.mrb[0].mxu0
    %v138 = vadd.f32 0.0, %v137
    %v139 = vpop.f32.mrb[0].mxu0
    %140 = vdwg.mxu0
    %v141 = vadd.f32 %v69, %v138
    %142 = vst [vmem:[#allocation2] sm:$0xff] %v141
    // Predicated region
    $region26: #{tpu_custom_call.1} parent=1 // pred_check
      %p143 = pneg %p41
    $region27: #{tpu_custom_call.1} parent=1 // pred_check_branch
      %145 = sbr.rel (%p143) target = $region29
    $region28: #{tpu_custom_call.1} parent=1 // pred_region
      %v146 = vld [vmem:[#allocation2] sm:$0xff]
      %147 = vst [vmem:[#allocation8] sm:$0xff] %v146
    $region29: #{tpu_custom_call.1} parent=1 // pred_fallthru
      _
    // Predicated region
    $region30: #{tpu_custom_call.1} parent=1 // pred_check
      _
    $region31: #{tpu_custom_call.1} parent=1 // pred_check_branch
      %149 = sbr.rel (0) target = $region33
    $region32: #{tpu_custom_call.1} parent=1 // pred_region
      %s151 = ssub.s32 128, 128
      %152 = vsyncadd [#allocation5], %s151
      %s154 = sshll.u32 [#allocation8], 4
      %s155 = int_to_ptr.vmem [resolvable:$true] %s154
      %157 = dma.vmem_to_hbm [thread:$0]  %s155, 128, %s3, [#allocation5]
    $region33: #{tpu_custom_call.1} parent=1 // pred_fallthru
      _
    // Predicated region
    $region34: #{tpu_custom_call.1} parent=1 // pred_check
      _
    $region35: #{tpu_custom_call.1} parent=1 // pred_check_branch
      %159 = sbr.rel (0) target = $region37
    $region36: #{tpu_custom_call.1} parent=1 // pred_region
      %160 = dma.done [#allocation5], 128
    $region37: #{tpu_custom_call.1} parent=1 // pred_fallthru
      _
    %161 = vsyncpa [#allocation4], 1
    %162 = vsyncpa [#allocation7], 1
    %163 = vsyncpa [#allocation5], 1

</llo_original>
